<compile_context>
chip_gen: v5e
topology: v5e:2x2
jax: 0.10.0
libtpu: 0.0.40
codegen_flags: <defaults>
</compile_context>

<pallas_src>
import functools
import random

import jax
import jax.numpy as jnp
from jax import lax
from jax.experimental import pallas as pl
from jax.experimental.pallas import tpu as pltpu

MEAS_DIM = 1
HIDDEN = 32
BERT_DIM = 768
VOCAB = 100
DROPOUT_PROB = 0.5


def _fused_kernel(drop_measurement, drop_text, seq_len, meas_dim, *refs):
    """Transposed layout: batch on lanes (last axis), features on sublanes."""
    refs = list(refs)
    out_ref = refs.pop()                               # [1, TB]
    it = iter(refs)

    if not drop_measurement:
        meas_ref = next(it)                            # [Dm, TB]
        w1_ref = next(it)                              # [H, Dm]
        b1_ref = next(it)                              # [H, 1]
        vm_ref = next(it)                              # [H, 1]   (= w2^T wc_m)
    if not drop_text:
        ids_ref = next(it)                             # [S, TB] int32
        mask_ref = next(it)                            # [S, TB] f32
        vt_ref = next(it)                              # [VOCAB, 1] (= E wp^T wc_t)
    bias_ref = next(it)                                # [1, 1] fully-folded bias

    tb = out_ref.shape[1]
    logit = jnp.zeros((1, tb), jnp.float32) + bias_ref[...]

    # ---- measurement branch: Linear(Dm,H) -> ReLU, then folded classifier ----
    if not drop_measurement:
        w1 = w1_ref[...]
        meas = meas_ref[...]
        if meas_dim == 1:
            pre = w1 * meas                            # K=1: VPU outer product
        else:
            pre = jnp.dot(w1, meas, preferred_element_type=jnp.float32)
        h = jnp.maximum(pre + b1_ref[...], 0.0)        # [H, TB]
        logit = logit + jnp.sum(h * vm_ref[...], axis=0, keepdims=True)

    # ---- text branch: in-kernel one-hot gather + masked mean pool, folded
    #      through projection and classifier into a [VOCAB] vector ----
    if not drop_text:
        ids = ids_ref[...]                             # [S, TB]
        mask = mask_ref[...]                           # [S, TB]
        denom = jnp.maximum(jnp.sum(mask, axis=0, keepdims=True), 1.0)  # [1,TB]
        mask_norm = mask * (1.0 / denom)               # normalize the small mask
        vocab_iota = lax.broadcasted_iota(jnp.int32, (VOCAB, tb), 0)
        zero = jnp.zeros((VOCAB, tb), jnp.float32)
        if seq_len <= 32:                              # static unroll for small S
            counts = zero
            for s in range(seq_len):
                counts = counts + jnp.where(vocab_iota == ids[s:s + 1, :],
                                            mask_norm[s:s + 1, :], 0.0)
        else:                                          # bounded code size for long S
            def body(s, counts):
                id_s = lax.dynamic_slice_in_dim(ids, s, 1, axis=0)
                m_s = lax.dynamic_slice_in_dim(mask_norm, s, 1, axis=0)
                return counts + jnp.where(vocab_iota == id_s, m_s, 0.0)
            counts = lax.fori_loop(0, seq_len, body, zero)
        logit = logit + jnp.sum(counts * vt_ref[...], axis=0, keepdims=True)

    out_ref[...] = jax.nn.sigmoid(logit)


def _round_up(x, m):
    return ((x + m - 1) // m) * m


def _pick_batch_tile(B):
    """Lane-dense batch tile.

    After the algebraic folds the per-tile footprint is only a few hundred KB,
    so amortize grid-step overhead with big tiles (<=2048), but keep >= 2 tiles
    whenever B >= 256 so both v7x TensorCores get work.
    """
    if B < 128:
        return _round_up(max(B, 1), 8)                 # single full tile
    b_pad128 = _round_up(B, 128)
    if b_pad128 >= 256:
        return min(2048, _round_up(b_pad128 // 2, 128))
    return b_pad128


def multimodal_forward(params, measurements, input_ids, attention_mask,
                       training=True, seed=0, forced_drops=None):
    """Mirrors MultimodalModelWithDropout.forward (host-side modality dropout).

    `forced_drops=(dm, dt)` is test-only plumbing to exercise each static
    kernel variant deterministically.
    """
    if forced_drops is not None:
        drop_measurement, drop_text = forced_drops
    else:
        rng = random.Random(seed)
        drop_measurement = False
        drop_text = False
        if training:
            drop_measurement = rng.random() < DROPOUT_PROB
            drop_text = rng.random() < DROPOUT_PROB
            if drop_measurement and drop_text:
                drop_measurement = rng.random() < 0.5
                drop_text = not drop_measurement

    B, Dm = measurements.shape
    S = input_ids.shape[1]

    tb = _pick_batch_tile(B)
    b_pad = _round_up(B, tb)
    n_tiles = b_pad // tb
    pad = b_pad - B

    # Fully-folded scalar bias for this drop variant (constant branch folded in).
    bias = params["bc"]
    bias = bias + (params["c_miss_m"] if drop_measurement else params["c_m"])
    bias = bias + (params["c_miss_t"] if drop_text else params["c_t"])

    def const_spec(arr):
        return pl.BlockSpec(arr.shape, lambda i: (0, 0))   # resident weight

    def batch_spec(rows):
        return pl.BlockSpec((rows, tb), lambda i: (0, i))  # tiled over batch

    args = []
    in_specs = []
    # TODO(synk): callers with batch-last data pipelines should pass [.., B]
    # arrays directly to skip these host transpose/pad HBM passes.
    if not drop_measurement:
        meas_t = measurements.astype(jnp.float32).T         # [Dm, B]
        if pad:
            meas_t = jnp.pad(meas_t, ((0, 0), (0, pad)))
        args += [meas_t, params["w1"], params["b1"], params["v_m"]]
        in_specs += [batch_spec(Dm), const_spec(params["w1"]),
                     const_spec(params["b1"]), const_spec(params["v_m"])]
    if not drop_text:
        ids_t = input_ids.astype(jnp.int32).T                # [S, B]
        mask_t = attention_mask.astype(jnp.float32).T        # [S, B]
        if pad:
            ids_t = jnp.pad(ids_t, ((0, 0), (0, pad)))
            mask_t = jnp.pad(mask_t, ((0, 0), (0, pad)))     # padded rows: mask 0
        args += [ids_t, mask_t, params["v_t"]]
        in_specs += [batch_spec(S), batch_spec(S), const_spec(params["v_t"])]
    args.append(bias)
    in_specs.append(const_spec(bias))

    flops = b_pad * (2 * HIDDEN * Dm + 4 * HIDDEN + 4 * S * VOCAB + 3 * VOCAB + 8)
    bytes_accessed = sum(int(a.size) * a.dtype.itemsize for a in args) + b_pad * 4
    cost = pl.CostEstimate(flops=int(flops), transcendentals=2 * b_pad,
                           bytes_accessed=int(bytes_accessed))

    kernel = functools.partial(_fused_kernel, drop_measurement, drop_text, S, Dm)
    out = pl.pallas_call(
        kernel,
        out_shape=jax.ShapeDtypeStruct((1, b_pad), jnp.float32),
        grid=(n_tiles,),
        in_specs=in_specs,
        out_specs=pl.BlockSpec((1, tb), lambda i: (0, i)),
        compiler_params=pltpu.CompilerParams(
            dimension_semantics=("parallel",),
            vmem_limit_bytes=32 * 1024 * 1024),
        cost_estimate=cost,
    )(*args)

    probs = out[0, :B].reshape(B, 1)
    return probs, (drop_measurement, drop_text)


def _reference_forward(params, measurements, input_ids, attention_mask,
                       drop_measurement, drop_text):
    """Pure-JAX reference mirroring the PyTorch forward."""
    B = measurements.shape[0]
    with jax.default_matmul_precision("highest"):
        if drop_measurement:
            m_emb = jnp.broadcast_to(params["miss_m"].T, (B, HIDDEN))
        else:
            h = jnp.maximum(measurements @ params["w1"].T + params["b1"].T, 0.0)
            m_emb = h @ params["w2"].T + params["b2"].T
        if drop_text:
            t_emb = jnp.broadcast_to(params["miss_t"].T, (B, HIDDEN))
        else:
            tok = params["embed_table"][input_ids]          # [B, S, 768]
            mask = attention_mask.astype(jnp.float32)
            pooled = jnp.sum(tok * mask[:, :, None], axis=1) / jnp.sum(
                mask, axis=1, keepdims=True)
            t_emb = pooled @ params["wp"].T + params["bp"].T
        combined = jnp.concatenate([m_emb, t_emb], axis=1)
        wc = jnp.concatenate([params["wc_m"], params["wc_t"]], axis=0)  # [2H,1]
        return jax.nn.sigmoid(combined @ wc + params["bc"])


def init_params(key):
    ks = jax.random.split(key, 12)
    scale = 0.05
    w1 = scale * jax.random.normal(ks[0], (HIDDEN, MEAS_DIM), jnp.float32)
    b1 = scale * jax.random.normal(ks[1], (HIDDEN, 1), jnp.float32)
    w2 = scale * jax.random.normal(ks[2], (HIDDEN, HIDDEN), jnp.float32)
    b2 = scale * jax.random.normal(ks[3], (HIDDEN, 1), jnp.float32)
    embed_table = scale * jax.random.normal(ks[4], (VOCAB, BERT_DIM), jnp.float32)
    wp = scale * jax.random.normal(ks[5], (HIDDEN, BERT_DIM), jnp.float32)
    bp = scale * jax.random.normal(ks[6], (HIDDEN, 1), jnp.float32)
    wc_m = scale * jax.random.normal(ks[7], (HIDDEN, 1), jnp.float32)
    wc_t = scale * jax.random.normal(ks[8], (HIDDEN, 1), jnp.float32)
    bc = scale * jax.random.normal(ks[9], (1, 1), jnp.float32)
    miss_m = jax.random.normal(ks[10], (HIDDEN, 1), jnp.float32)
    miss_t = jax.random.normal(ks[11], (HIDDEN, 1), jnp.float32)

    # Host-side algebraic folds: everything after the pooled / hidden features
    # is linear into a single logit, so collapse it into tiny kernel operands.
    # Done once, in highest precision, so the kernel sees exact f32 weights.
    with jax.default_matmul_precision("highest"):
        v_m = w2.T @ wc_m                                 # [HIDDEN, 1]
        c_m = b2.T @ wc_m                                 # [1, 1]
        v_t = embed_table @ (wp.T @ wc_t)                 # [VOCAB, 1]
        c_t = bp.T @ wc_t                                 # [1, 1]
        c_miss_m = miss_m.T @ wc_m                        # [1, 1]
        c_miss_t = miss_t.T @ wc_t                        # [1, 1]

    return {
        # raw (PyTorch-layout) parameters for the reference path
        "w1": w1, "b1": b1, "w2": w2, "b2": b2,
        "embed_table": embed_table, "wp": wp, "bp": bp,
        "wc_m": wc_m, "wc_t": wc_t, "bc": bc,
        "miss_m": miss_m, "miss_t": miss_t,
        # folded kernel operands
        "v_m": v_m, "c_m": c_m, "v_t": v_t, "c_t": c_t,
        "c_miss_m": c_miss_m, "c_miss_t": c_miss_t,
    }


if __name__ == "__main__":
    key = jax.random.PRNGKey(0)
    pkey, mkey, ikey = jax.random.split(key, 3)
    params = init_params(pkey)

    B, S = 2, 8
    measurements = jax.random.normal(mkey, (B, MEAS_DIM), jnp.float32)
    input_ids = jax.random.randint(ikey, (B, S), 0, VOCAB, jnp.int32)
    attention_mask = jnp.ones((B, S), jnp.int32).at[1, 5:].set(0)

    cases = [
        dict(training=False, seed=0, forced_drops=None),         # eval: no drops
        dict(training=True, seed=0, forced_drops=None),          # host-RNG path
        dict(training=True, seed=0, forced_drops=(True, False)),  # drop meas
        dict(training=True, seed=0, forced_drops=(False, True)),  # drop text
    ]
    for case in cases:
        out, (dm, dt) = multimodal_forward(params, measurements, input_ids,
                                           attention_mask, **case)
        out = jax.block_until_ready(out)
        ref = _reference_forward(params, measurements, input_ids,
                                 attention_mask, dm, dt)
        assert out.shape == (B, 1)
        assert jnp.allclose(out, ref, atol=1e-5, rtol=1e-5), (dm, dt, out, ref)

    print("KERNEL_OK")
</pallas_src>

<mosaic_0001>
module attributes {stable_mosaic.version = 11 : i64} {
  func.func @_fused_kernel(%arg0: i32, %arg1: memref<1x8xf32, #tpu.memory_space<vmem>>, %arg2: memref<32x1xf32, #tpu.memory_space<vmem>>, %arg3: memref<32x1xf32, #tpu.memory_space<vmem>>, %arg4: memref<32x1xf32, #tpu.memory_space<vmem>>, %arg5: memref<8x8xi32, #tpu.memory_space<vmem>>, %arg6: memref<8x8xf32, #tpu.memory_space<vmem>>, %arg7: memref<100x1xf32, #tpu.memory_space<vmem>>, %arg8: memref<1x1xf32, #tpu.memory_space<vmem>>, %arg9: memref<1x8xf32, #tpu.memory_space<vmem>>) attributes {dimension_semantics = [#tpu.dimension_semantics<parallel>], iteration_bounds = array<i64: 1>, scalar_prefetch = 0 : i64, scratch_operands = 0 : i64, tpu.core_type = #tpu.core_type<tc>, window_params = [{transform_indices = @transform_0, window_bounds = array<i64: 1, 8>}, {pipeline_mode = #tpu.pipeline_mode<synchronous>, transform_indices = @transform_1, window_bounds = array<i64: 32, 1>}, {pipeline_mode = #tpu.pipeline_mode<synchronous>, transform_indices = @transform_2, window_bounds = array<i64: 32, 1>}, {pipeline_mode = #tpu.pipeline_mode<synchronous>, transform_indices = @transform_3, window_bounds = array<i64: 32, 1>}, {transform_indices = @transform_4, window_bounds = array<i64: 8, 8>}, {transform_indices = @transform_5, window_bounds = array<i64: 8, 8>}, {pipeline_mode = #tpu.pipeline_mode<synchronous>, transform_indices = @transform_6, window_bounds = array<i64: 100, 1>}, {pipeline_mode = #tpu.pipeline_mode<synchronous>, transform_indices = @transform_7, window_bounds = array<i64: 1, 1>}, {transform_indices = @transform_8, window_bounds = array<i64: 1, 8>}]} {
    %cst = arith.constant 0.000000e+00 : f32
    %0 = vector.broadcast %cst : f32 to vector<1x8xf32>
    %c0 = arith.constant 0 : index
    %c0_0 = arith.constant 0 : index
    %1 = vector.load %arg8[%c0, %c0_0] : memref<1x1xf32, #tpu.memory_space<vmem>>, vector<1x1xf32>
    %2 = vector.broadcast %1 : vector<1x1xf32> to vector<1x8xf32>
    %3 = arith.addf %0, %2 : vector<1x8xf32>
    %c0_1 = arith.constant 0 : index
    %c0_2 = arith.constant 0 : index
    %4 = vector.load %arg2[%c0_1, %c0_2] : memref<32x1xf32, #tpu.memory_space<vmem>>, vector<32x1xf32>
    %c0_3 = arith.constant 0 : index
    %c0_4 = arith.constant 0 : index
    %5 = vector.load %arg1[%c0_3, %c0_4] : memref<1x8xf32, #tpu.memory_space<vmem>>, vector<1x8xf32>
    %6 = vector.broadcast %4 : vector<32x1xf32> to vector<32x8xf32>
    %7 = vector.broadcast %5 : vector<1x8xf32> to vector<32x8xf32>
    %8 = arith.mulf %6, %7 : vector<32x8xf32>
    %c0_5 = arith.constant 0 : index
    %c0_6 = arith.constant 0 : index
    %9 = vector.load %arg3[%c0_5, %c0_6] : memref<32x1xf32, #tpu.memory_space<vmem>>, vector<32x1xf32>
    %10 = vector.broadcast %9 : vector<32x1xf32> to vector<32x8xf32>
    %11 = arith.addf %8, %10 : vector<32x8xf32>
    %cst_7 = arith.constant 0.000000e+00 : f32
    %12 = vector.broadcast %cst_7 : f32 to vector<32x8xf32>
    %13 = arith.maximumf %11, %12 : vector<32x8xf32>
    %c0_8 = arith.constant 0 : index
    %c0_9 = arith.constant 0 : index
    %14 = vector.load %arg4[%c0_8, %c0_9] : memref<32x1xf32, #tpu.memory_space<vmem>>, vector<32x1xf32>
    %15 = vector.broadcast %14 : vector<32x1xf32> to vector<32x8xf32>
    %16 = arith.mulf %13, %15 : vector<32x8xf32>
    %cst_10 = arith.constant dense<0.000000e+00> : vector<8xf32>
    %17 = vector.multi_reduction <add>, %16, %cst_10 [0] : vector<32x8xf32> to vector<8xf32>
    %18 = vector.shape_cast %17 : vector<8xf32> to vector<1x8xf32>
    %19 = arith.addf %3, %18 : vector<1x8xf32>
    %c0_11 = arith.constant 0 : index
    %c0_12 = arith.constant 0 : index
    %20 = vector.load %arg5[%c0_11, %c0_12] : memref<8x8xi32, #tpu.memory_space<vmem>>, vector<8x8xi32>
    %c0_13 = arith.constant 0 : index
    %c0_14 = arith.constant 0 : index
    %21 = vector.load %arg6[%c0_13, %c0_14] : memref<8x8xf32, #tpu.memory_space<vmem>>, vector<8x8xf32>
    %cst_15 = arith.constant dense<0.000000e+00> : vector<8xf32>
    %22 = vector.multi_reduction <add>, %21, %cst_15 [0] : vector<8x8xf32> to vector<8xf32>
    %23 = vector.shape_cast %22 : vector<8xf32> to vector<1x8xf32>
    %cst_16 = arith.constant 1.000000e+00 : f32
    %24 = vector.broadcast %cst_16 : f32 to vector<1x8xf32>
    %25 = arith.maximumf %23, %24 : vector<1x8xf32>
    %cst_17 = arith.constant 1.000000e+00 : f32
    %26 = vector.broadcast %cst_17 : f32 to vector<1x8xf32>
    %27 = arith.divf %26, %25 : vector<1x8xf32>
    %28 = vector.broadcast %27 : vector<1x8xf32> to vector<8x8xf32>
    %29 = arith.mulf %21, %28 : vector<8x8xf32>
    %30 = tpu.iota {dimensions = array<i32: 0>} : vector<100x8xi32>
    %cst_18 = arith.constant 0.000000e+00 : f32
    %31 = vector.broadcast %cst_18 : f32 to vector<100x8xf32>
    %32 = vector.extract_strided_slice %20 {offsets = [0, 0], sizes = [1, 8], strides = [1, 1]} : vector<8x8xi32> to vector<1x8xi32>
    %33 = vector.broadcast %32 : vector<1x8xi32> to vector<100x8xi32>
    %34 = arith.cmpi eq, %30, %33 : vector<100x8xi32>
    %35 = vector.extract_strided_slice %29 {offsets = [0, 0], sizes = [1, 8], strides = [1, 1]} : vector<8x8xf32> to vector<1x8xf32>
    %cst_19 = arith.constant 0.000000e+00 : f32
    %36 = vector.shape_cast %35 : vector<1x8xf32> to vector<1x8xf32>
    %37 = vector.broadcast %36 : vector<1x8xf32> to vector<100x8xf32>
    %38 = vector.broadcast %cst_19 : f32 to vector<100x8xf32>
    %39 = arith.select %34, %37, %38 : vector<100x8xi1>, vector<100x8xf32>
    %40 = arith.addf %31, %39 : vector<100x8xf32>
    %41 = vector.extract_strided_slice %20 {offsets = [1, 0], sizes = [1, 8], strides = [1, 1]} : vector<8x8xi32> to vector<1x8xi32>
    %42 = vector.broadcast %41 : vector<1x8xi32> to vector<100x8xi32>
    %43 = arith.cmpi eq, %30, %42 : vector<100x8xi32>
    %44 = vector.extract_strided_slice %29 {offsets = [1, 0], sizes = [1, 8], strides = [1, 1]} : vector<8x8xf32> to vector<1x8xf32>
    %cst_20 = arith.constant 0.000000e+00 : f32
    %45 = vector.shape_cast %44 : vector<1x8xf32> to vector<1x8xf32>
    %46 = vector.broadcast %45 : vector<1x8xf32> to vector<100x8xf32>
    %47 = vector.broadcast %cst_20 : f32 to vector<100x8xf32>
    %48 = arith.select %43, %46, %47 : vector<100x8xi1>, vector<100x8xf32>
    %49 = arith.addf %40, %48 : vector<100x8xf32>
    %50 = vector.extract_strided_slice %20 {offsets = [2, 0], sizes = [1, 8], strides = [1, 1]} : vector<8x8xi32> to vector<1x8xi32>
    %51 = vector.broadcast %50 : vector<1x8xi32> to vector<100x8xi32>
    %52 = arith.cmpi eq, %30, %51 : vector<100x8xi32>
    %53 = vector.extract_strided_slice %29 {offsets = [2, 0], sizes = [1, 8], strides = [1, 1]} : vector<8x8xf32> to vector<1x8xf32>
    %cst_21 = arith.constant 0.000000e+00 : f32
    %54 = vector.shape_cast %53 : vector<1x8xf32> to vector<1x8xf32>
    %55 = vector.broadcast %54 : vector<1x8xf32> to vector<100x8xf32>
    %56 = vector.broadcast %cst_21 : f32 to vector<100x8xf32>
    %57 = arith.select %52, %55, %56 : vector<100x8xi1>, vector<100x8xf32>
    %58 = arith.addf %49, %57 : vector<100x8xf32>
    %59 = vector.extract_strided_slice %20 {offsets = [3, 0], sizes = [1, 8], strides = [1, 1]} : vector<8x8xi32> to vector<1x8xi32>
    %60 = vector.broadcast %59 : vector<1x8xi32> to vector<100x8xi32>
    %61 = arith.cmpi eq, %30, %60 : vector<100x8xi32>
    %62 = vector.extract_strided_slice %29 {offsets = [3, 0], sizes = [1, 8], strides = [1, 1]} : vector<8x8xf32> to vector<1x8xf32>
    %cst_22 = arith.constant 0.000000e+00 : f32
    %63 = vector.shape_cast %62 : vector<1x8xf32> to vector<1x8xf32>
    %64 = vector.broadcast %63 : vector<1x8xf32> to vector<100x8xf32>
    %65 = vector.broadcast %cst_22 : f32 to vector<100x8xf32>
    %66 = arith.select %61, %64, %65 : vector<100x8xi1>, vector<100x8xf32>
    %67 = arith.addf %58, %66 : vector<100x8xf32>
    %68 = vector.extract_strided_slice %20 {offsets = [4, 0], sizes = [1, 8], strides = [1, 1]} : vector<8x8xi32> to vector<1x8xi32>
    %69 = vector.broadcast %68 : vector<1x8xi32> to vector<100x8xi32>
    %70 = arith.cmpi eq, %30, %69 : vector<100x8xi32>
    %71 = vector.extract_strided_slice %29 {offsets = [4, 0], sizes = [1, 8], strides = [1, 1]} : vector<8x8xf32> to vector<1x8xf32>
    %cst_23 = arith.constant 0.000000e+00 : f32
    %72 = vector.shape_cast %71 : vector<1x8xf32> to vector<1x8xf32>
    %73 = vector.broadcast %72 : vector<1x8xf32> to vector<100x8xf32>
    %74 = vector.broadcast %cst_23 : f32 to vector<100x8xf32>
    %75 = arith.select %70, %73, %74 : vector<100x8xi1>, vector<100x8xf32>
    %76 = arith.addf %67, %75 : vector<100x8xf32>
    %77 = vector.extract_strided_slice %20 {offsets = [5, 0], sizes = [1, 8], strides = [1, 1]} : vector<8x8xi32> to vector<1x8xi32>
    %78 = vector.broadcast %77 : vector<1x8xi32> to vector<100x8xi32>
    %79 = arith.cmpi eq, %30, %78 : vector<100x8xi32>
    %80 = vector.extract_strided_slice %29 {offsets = [5, 0], sizes = [1, 8], strides = [1, 1]} : vector<8x8xf32> to vector<1x8xf32>
    %cst_24 = arith.constant 0.000000e+00 : f32
    %81 = vector.shape_cast %80 : vector<1x8xf32> to vector<1x8xf32>
    %82 = vector.broadcast %81 : vector<1x8xf32> to vector<100x8xf32>
    %83 = vector.broadcast %cst_24 : f32 to vector<100x8xf32>
    %84 = arith.select %79, %82, %83 : vector<100x8xi1>, vector<100x8xf32>
    %85 = arith.addf %76, %84 : vector<100x8xf32>
    %86 = vector.extract_strided_slice %20 {offsets = [6, 0], sizes = [1, 8], strides = [1, 1]} : vector<8x8xi32> to vector<1x8xi32>
    %87 = vector.broadcast %86 : vector<1x8xi32> to vector<100x8xi32>
    %88 = arith.cmpi eq, %30, %87 : vector<100x8xi32>
    %89 = vector.extract_strided_slice %29 {offsets = [6, 0], sizes = [1, 8], strides = [1, 1]} : vector<8x8xf32> to vector<1x8xf32>
    %cst_25 = arith.constant 0.000000e+00 : f32
    %90 = vector.shape_cast %89 : vector<1x8xf32> to vector<1x8xf32>
    %91 = vector.broadcast %90 : vector<1x8xf32> to vector<100x8xf32>
    %92 = vector.broadcast %cst_25 : f32 to vector<100x8xf32>
    %93 = arith.select %88, %91, %92 : vector<100x8xi1>, vector<100x8xf32>
    %94 = arith.addf %85, %93 : vector<100x8xf32>
    %95 = vector.extract_strided_slice %20 {offsets = [7, 0], sizes = [1, 8], strides = [1, 1]} : vector<8x8xi32> to vector<1x8xi32>
    %96 = vector.broadcast %95 : vector<1x8xi32> to vector<100x8xi32>
    %97 = arith.cmpi eq, %30, %96 : vector<100x8xi32>
    %98 = vector.extract_strided_slice %29 {offsets = [7, 0], sizes = [1, 8], strides = [1, 1]} : vector<8x8xf32> to vector<1x8xf32>
    %cst_26 = arith.constant 0.000000e+00 : f32
    %99 = vector.shape_cast %98 : vector<1x8xf32> to vector<1x8xf32>
    %100 = vector.broadcast %99 : vector<1x8xf32> to vector<100x8xf32>
    %101 = vector.broadcast %cst_26 : f32 to vector<100x8xf32>
    %102 = arith.select %97, %100, %101 : vector<100x8xi1>, vector<100x8xf32>
    %103 = arith.addf %94, %102 : vector<100x8xf32>
    %c0_27 = arith.constant 0 : index
    %c0_28 = arith.constant 0 : index
    %104 = vector.load %arg7[%c0_27, %c0_28] : memref<100x1xf32, #tpu.memory_space<vmem>>, vector<100x1xf32>
    %105 = vector.broadcast %104 : vector<100x1xf32> to vector<100x8xf32>
    %106 = arith.mulf %103, %105 : vector<100x8xf32>
    %cst_29 = arith.constant dense<0.000000e+00> : vector<8xf32>
    %107 = vector.multi_reduction <add>, %106, %cst_29 [0] : vector<100x8xf32> to vector<8xf32>
    %108 = vector.shape_cast %107 : vector<8xf32> to vector<1x8xf32>
    %109 = arith.addf %19, %108 : vector<1x8xf32>
    %110 = arith.negf %109 : vector<1x8xf32>
    %111 = math.exp %110 : vector<1x8xf32>
    %cst_30 = arith.constant 1.000000e+00 : f32
    %112 = vector.broadcast %cst_30 : f32 to vector<1x8xf32>
    %113 = arith.addf %112, %111 : vector<1x8xf32>
    %114 = arith.divf %112, %113 : vector<1x8xf32>
    %c0_31 = arith.constant 0 : index
    %c0_32 = arith.constant 0 : index
    %115 = vector.load %arg9[%c0_31, %c0_32] : memref<1x8xf32, #tpu.memory_space<vmem>>, vector<1x8xf32>
    tpu.vector_store %arg9[%c0_31, %c0_32], %114 {strides = array<i32>} : memref<1x8xf32, #tpu.memory_space<vmem>>, vector<1x8xf32>,
    return
  }
  func.func @transform_0(%arg0: i32) -> (i32, i32) {
    %c0_i32 = arith.constant 0 : i32
    %c0_i32_0 = arith.constant 0 : i32
    return %c0_i32, %arg0 : i32, i32
  }
  func.func @transform_1(%arg0: i32) -> (i32, i32) {
    %c0_i32 = arith.constant 0 : i32
    %c0_i32_0 = arith.constant 0 : i32
    %c0_i32_1 = arith.constant 0 : i32
    return %c0_i32, %c0_i32_0 : i32, i32
  }
  func.func @transform_2(%arg0: i32) -> (i32, i32) {
    %c0_i32 = arith.constant 0 : i32
    %c0_i32_0 = arith.constant 0 : i32
    %c0_i32_1 = arith.constant 0 : i32
    return %c0_i32, %c0_i32_0 : i32, i32
  }
  func.func @transform_3(%arg0: i32) -> (i32, i32) {
    %c0_i32 = arith.constant 0 : i32
    %c0_i32_0 = arith.constant 0 : i32
    %c0_i32_1 = arith.constant 0 : i32
    return %c0_i32, %c0_i32_0 : i32, i32
  }
  func.func @transform_4(%arg0: i32) -> (i32, i32) {
    %c0_i32 = arith.constant 0 : i32
    %c0_i32_0 = arith.constant 0 : i32
    return %c0_i32, %arg0 : i32, i32
  }
  func.func @transform_5(%arg0: i32) -> (i32, i32) {
    %c0_i32 = arith.constant 0 : i32
    %c0_i32_0 = arith.constant 0 : i32
    return %c0_i32, %arg0 : i32, i32
  }
  func.func @transform_6(%arg0: i32) -> (i32, i32) {
    %c0_i32 = arith.constant 0 : i32
    %c0_i32_0 = arith.constant 0 : i32
    %c0_i32_1 = arith.constant 0 : i32
    return %c0_i32, %c0_i32_0 : i32, i32
  }
  func.func @transform_7(%arg0: i32) -> (i32, i32) {
    %c0_i32 = arith.constant 0 : i32
    %c0_i32_0 = arith.constant 0 : i32
    %c0_i32_1 = arith.constant 0 : i32
    return %c0_i32, %c0_i32_0 : i32, i32
  }
  func.func @transform_8(%arg0: i32) -> (i32, i32) {
    %c0_i32 = arith.constant 0 : i32
    %c0_i32_0 = arith.constant 0 : i32
    return %c0_i32, %arg0 : i32, i32
  }
}

</mosaic_0001>

<llo_original>
// kernel: tpu_custom_call.1
$region0: #{tpu_custom_call.1}
  #allocation0 [shape = 'u32[]', space=smem, size = 0x4, offset = 0x4, fixed_abs, tag = 'smem constant byte address 0x4 - core index']
  #allocation1 [shape = 'u32[72,128]{1,0:T(1,128)}', space=vmem, size = 0x9000, scoped, tag = 'internal scratch']
  #allocation2 [shape = 'f32[1,1]{1,0:T(1,128)S(1)}', space=vmem, size = 0x200, scoped, tag = 'scoped memory for tpu_custom_call.1']
  %s0 = inlined_call_operand.vmem [shape: f32[1,8], index: 0, kind: input, shape index: {}]
  %s1 = inlined_call_operand.vmem [shape: f32[32,1], index: 1, kind: input, shape index: {}]
  %s2 = inlined_call_operand.vmem [shape: f32[32,1], index: 2, kind: input, shape index: {}]
  %s3 = inlined_call_operand.vmem [shape: f32[32,1], index: 3, kind: input, shape index: {}]
  %s4 = inlined_call_operand.vmem [shape: s32[8,8], index: 4, kind: input, shape index: {}]
  %s5 = inlined_call_operand.vmem [shape: f32[8,8], index: 5, kind: input, shape index: {}]
  %s6 = inlined_call_operand.vmem [shape: f32[100,1], index: 6, kind: input, shape index: {}]
  %s7 = inlined_call_operand.<no memory space> [shape: f32[1,1], index: 7, kind: input, shape index: {}]
  %s8 = inlined_call_operand.hbm [shape: f32[1,8], index: 8, kind: output, shape index: {}]
  %s9 = sld [smem:[#allocation0]]
  $region42: #{tpu_custom_call.1} parent=0
    _
  %s11 = ssub.s32 1, %s9
  %s12 = scalar_select 0, %s11, %s9
  %v13 = vstv %s7
  %14 = vst [vmem:[#allocation2] sm:$0x1] %v13
  $region1: #{tpu_custom_call.1} parent=0
    #allocation3 [shape = 'u8[512]{0}', space=vmem, size = 0x400, scoped, tag = 'output window, operand 0, single buffered']
    #allocation4 [shape = 's32[1]{0}', space=sflag, size = 0x4, scoped, tag = 'scoped memory for tpu_custom_call.1']
    %15 = vsyncpa [#allocation4], 0
    // Predicated region
    $region2: #{tpu_custom_call.1} parent=1 // pred_check
      _
    $region3: #{tpu_custom_call.1} parent=1 // pred_check_branch
      %17 = sbr.rel (0) target = $region5
    $region4: #{tpu_custom_call.1} parent=1 // pred_region
      _
    $region5: #{tpu_custom_call.1} parent=1 // pred_fallthru
      _
    // Predicated region
    $region6: #{tpu_custom_call.1} parent=1 // pred_check
      _
    $region7: #{tpu_custom_call.1} parent=1 // pred_check_branch
      %19 = sbr.rel (0) target = $region9
    $region8: #{tpu_custom_call.1} parent=1 // pred_region
      _
    $region9: #{tpu_custom_call.1} parent=1 // pred_fallthru
      _
    // Predicated region
    $region10: #{tpu_custom_call.1} parent=1 // pred_check
      _
    $region11: #{tpu_custom_call.1} parent=1 // pred_check_branch
      %21 = sbr.rel (0) target = $region13
    $region12: #{tpu_custom_call.1} parent=1 // pred_region
      _
    $region13: #{tpu_custom_call.1} parent=1 // pred_fallthru
      _
    // Predicated region
    $region14: #{tpu_custom_call.1} parent=1 // pred_check
      _
    $region15: #{tpu_custom_call.1} parent=1 // pred_check_branch
      %23 = sbr.rel (0) target = $region17
    $region16: #{tpu_custom_call.1} parent=1 // pred_region
      _
    $region17: #{tpu_custom_call.1} parent=1 // pred_fallthru
      _
    // Predicated region
    $region18: #{tpu_custom_call.1} parent=1 // pred_check
      _
    $region19: #{tpu_custom_call.1} parent=1 // pred_check_branch
      %25 = sbr.rel (0) target = $region21
    $region20: #{tpu_custom_call.1} parent=1 // pred_region
      _
    $region21: #{tpu_custom_call.1} parent=1 // pred_fallthru
      _
    // Predicated region
    $region22: #{tpu_custom_call.1} parent=1 // pred_check
      _
    $region23: #{tpu_custom_call.1} parent=1 // pred_check_branch
      %27 = sbr.rel (0) target = $region25
    $region24: #{tpu_custom_call.1} parent=1 // pred_region
      _
    $region25: #{tpu_custom_call.1} parent=1 // pred_fallthru
      _
    // Predicated region
    $region26: #{tpu_custom_call.1} parent=1 // pred_check
      _
    $region27: #{tpu_custom_call.1} parent=1 // pred_check_branch
      %29 = sbr.rel (0) target = $region29
    $region28: #{tpu_custom_call.1} parent=1 // pred_region
      _
    $region29: #{tpu_custom_call.1} parent=1 // pred_fallthru
      _
    // Predicated region
    $region30: #{tpu_custom_call.1} parent=1 // pred_check
      _
    $region31: #{tpu_custom_call.1} parent=1 // pred_check_branch
      %31 = sbr.rel (0) target = $region33
    $region32: #{tpu_custom_call.1} parent=1 // pred_region
      _
    $region33: #{tpu_custom_call.1} parent=1 // pred_fallthru
      _
    %v32 = vld [vmem:[#allocation2] sm:$0x1]
    %34 = vset.pattern.permute.xlu0 0
    %35 = vperm.xlu0 %34, %v32
    %v36 = vpop.permute.xlu0 %35
    %v38 = vperm.slane %v36, 0
    %v39 = vadd.f32 %v38, 0.0
    %v40 = vld [vmem:[%s1] sm:$0xff]
    %v41 = vld [vmem:[%s1 + $0x8] sm:$0xff]
    %v42 = vld [vmem:[%s1 + $0x10] sm:$0xff]
    %v43 = vld [vmem:[%s1 + $0x18] sm:$0xff]
    %v44 = vld [vmem:[%s0] sm:$0x1]
    %46 = vset.pattern.permute.xlu0 0
    %47 = vperm.xlu0 %46, %v40
    %v48 = vpop.permute.xlu0 %47
    %51 = vset.pattern.permute.xlu0 0
    %52 = vperm.xlu0 %51, %v41
    %v53 = vpop.permute.xlu0 %52
    %56 = vset.pattern.permute.xlu0 0
    %57 = vperm.xlu0 %56, %v42
    %v58 = vpop.permute.xlu0 %57
    %61 = vset.pattern.permute.xlu0 0
    %62 = vperm.xlu0 %61, %v43
    %v63 = vpop.permute.xlu0 %62
    %v66 = vperm.slane %v44, 0
    %v68 = vmul.f32 %v48, %v66
    %v69 = vmul.f32 %v53, %v66
    %v70 = vmul.f32 %v58, %v66
    %v71 = vmul.f32 %v63, %v66
    %v72 = vld [vmem:[%s2] sm:$0xff]
    %v73 = vld [vmem:[%s2 + $0x8] sm:$0xff]
    %v74 = vld [vmem:[%s2 + $0x10] sm:$0xff]
    %v75 = vld [vmem:[%s2 + $0x18] sm:$0xff]
    %77 = vset.pattern.permute.xlu0 0
    %78 = vperm.xlu0 %77, %v72
    %v79 = vpop.permute.xlu0 %78
    %82 = vset.pattern.permute.xlu0 0
    %83 = vperm.xlu0 %82, %v73
    %v84 = vpop.permute.xlu0 %83
    %87 = vset.pattern.permute.xlu0 0
    %88 = vperm.xlu0 %87, %v74
    %v89 = vpop.permute.xlu0 %88
    %92 = vset.pattern.permute.xlu0 0
    %93 = vperm.xlu0 %92, %v75
    %v94 = vpop.permute.xlu0 %93
    %v96 = vadd.f32 %v68, %v79
    %v97 = vadd.f32 %v69, %v84
    %v98 = vadd.f32 %v70, %v89
    %v99 = vadd.f32 %v71, %v94
    %v100 = vmax.f32 %v96, 0.0
    %v101 = vmax.f32 %v97, 0.0
    %v102 = vmax.f32 %v98, 0.0
    %v103 = vmax.f32 %v99, 0.0
    %v104 = vld [vmem:[%s3] sm:$0xff]
    %v105 = vld [vmem:[%s3 + $0x8] sm:$0xff]
    %v106 = vld [vmem:[%s3 + $0x10] sm:$0xff]
    %v107 = vld [vmem:[%s3 + $0x18] sm:$0xff]
    %109 = vset.pattern.permute.xlu0 0
    %110 = vperm.xlu0 %109, %v104
    %v111 = vpop.permute.xlu0 %110
    %114 = vset.pattern.permute.xlu0 0
    %115 = vperm.xlu0 %114, %v105
    %v116 = vpop.permute.xlu0 %115
    %119 = vset.pattern.permute.xlu0 0
    %120 = vperm.xlu0 %119, %v106
    %v121 = vpop.permute.xlu0 %120
    %124 = vset.pattern.permute.xlu0 0
    %125 = vperm.xlu0 %124, %v107
    %v126 = vpop.permute.xlu0 %125
    %v128 = vmul.f32 %v100, %v111
    %v129 = vmul.f32 %v101, %v116
    %v130 = vmul.f32 %v102, %v121
    %v131 = vmul.f32 %v103, %v126
    %vm132 = vcmask 64512
    %v133 = vsel %vm132, %v128, 0.0
    %v134 = vsel %vm132, %v129, 0.0
    %v135 = vadd.f32 %v133, %v134
    %v136 = vsel %vm132, %v130, 0.0
    %v137 = vadd.f32 %v135, %v136
    %v138 = vsel %vm132, %v131, 0.0
    %v139 = vadd.f32 %v137, %v138
    %v140 = vrot.slane %v139, 4
    %v141 = vadd.f32 %v139, %v140
    %v142 = vrot.slane %v141, 2
    %v143 = vadd.f32 %v141, %v142
    %v144 = vrot.slane %v143, 1
    %v145 = vadd.f32 %v143, %v144
    %v146 = vadd.f32 %v39, %v145
    %v147 = vld [vmem:[%s4] sm:$0xff]
    %v148 = vld [vmem:[%s5] sm:$0xff]
    %v149 = vsel %vm132, %v148, 0.0
    %v150 = vrot.slane %v149, 4
    %v151 = vadd.f32 %v149, %v150
    %v152 = vrot.slane %v151, 2
    %v153 = vadd.f32 %v151, %v152
    %v154 = vrot.slane %v153, 1
    %v155 = vadd.f32 %v153, %v154
    %v156 = vmax.f32 %v155, 1.0
    %v157 = vrcp.pop %v156
    %v158 = vmul.f32 %v156, %v157
    %v159 = vsub.f32 1.0, %v158
    %v160 = vmul.f32 %v157, %v159
    %v161 = vadd.f32 %v157, %v160
    %vm162 = vweird.f32 %v156
    %vm163 = vweird.f32 %v157
    %vm164 = vmor %vm162, %vm163
    %v165 = vsel %vm164, %v157, %v161
    %v166 = vand.u32 2147483647, %v156
    %vm167 = vcmp.eq.f32.partialorder %v166, 8.507059e+37
    %v168 = vand.u32 %v156, 2147483648
    %v169 = vor.u32 1.1754944e-38, %v168
    %v170 = vsel %vm167, %v169, %v165
    %v171 = vmul.f32 1.0, %v170
    %v172 = vmul.f32 %v148, %v171
    %v173 = vlaneseq
    %v174 = vshrl.u32 %v173, 7
    %v175 = vadd.s32 %v174, 8
    %v176 = vadd.s32 %v174, 16
    %v177 = vadd.s32 %v174, 24
    %v178 = vadd.s32 %v174, 32
    %v179 = vadd.s32 %v174, 40
    %v180 = vadd.s32 %v174, 48
    %v181 = vadd.s32 %v174, 56
    %v182 = vadd.s32 %v174, 64
    %v183 = vadd.s32 %v174, 72
    %v184 = vadd.s32 %v174, 80
    %v185 = vadd.s32 %v174, 88
    %v186 = vadd.s32 %v174, 96
    %v187 = vperm.slane %v147, 0
    %vm188 = vcmp.eq.s32.totalorder %v174, %v187
    %vm189 = vcmp.eq.s32.totalorder %v175, %v187
    %vm190 = vcmp.eq.s32.totalorder %v176, %v187
    %vm191 = vcmp.eq.s32.totalorder %v177, %v187
    %vm192 = vcmp.eq.s32.totalorder %v178, %v187
    %vm193 = vcmp.eq.s32.totalorder %v179, %v187
    %vm194 = vcmp.eq.s32.totalorder %v180, %v187
    %vm195 = vcmp.eq.s32.totalorder %v181, %v187
    %vm196 = vcmp.eq.s32.totalorder %v182, %v187
    %vm197 = vcmp.eq.s32.totalorder %v183, %v187
    %vm198 = vcmp.eq.s32.totalorder %v184, %v187
    %vm199 = vcmp.eq.s32.totalorder %v185, %v187
    %vm200 = vcmp.eq.s32.totalorder %v186, %v187
    %v201 = vperm.slane %v172, 0
    %v202 = vsel %vm188, %v201, 0.0
    %v203 = vsel %vm189, %v201, 0.0
    %v204 = vsel %vm190, %v201, 0.0
    %v205 = vsel %vm191, %v201, 0.0
    %v206 = vsel %vm192, %v201, 0.0
    %v207 = vsel %vm193, %v201, 0.0
    %v208 = vsel %vm194, %v201, 0.0
    %v209 = vsel %vm195, %v201, 0.0
    %v210 = vsel %vm196, %v201, 0.0
    %v211 = vsel %vm197, %v201, 0.0
    %v212 = vsel %vm198, %v201, 0.0
    %v213 = vsel %vm199, %v201, 0.0
    %v214 = vsel %vm200, %v201, 0.0
    %v215 = vadd.f32 %v202, 0.0
    %v216 = vadd.f32 %v203, 0.0
    %v217 = vadd.f32 %v204, 0.0
    %v218 = vadd.f32 %v205, 0.0
    %v219 = vadd.f32 %v206, 0.0
    %v220 = vadd.f32 %v207, 0.0
    %v221 = vadd.f32 %v208, 0.0
    %v222 = vadd.f32 %v209, 0.0
    %v223 = vadd.f32 %v210, 0.0
    %v224 = vadd.f32 %v211, 0.0
    %v225 = vadd.f32 %v212, 0.0
    %v226 = vadd.f32 %v213, 0.0
    %v227 = vadd.f32 %v214, 0.0
    %v228 = vperm.slane %v147, 1
    %vm229 = vcmp.eq.s32.totalorder %v174, %v228
    %vm230 = vcmp.eq.s32.totalorder %v175, %v228
    %vm231 = vcmp.eq.s32.totalorder %v176, %v228
    %vm232 = vcmp.eq.s32.totalorder %v177, %v228
    %vm233 = vcmp.eq.s32.totalorder %v178, %v228
    %vm234 = vcmp.eq.s32.totalorder %v179, %v228
    %vm235 = vcmp.eq.s32.totalorder %v180, %v228
    %vm236 = vcmp.eq.s32.totalorder %v181, %v228
    %vm237 = vcmp.eq.s32.totalorder %v182, %v228
    %vm238 = vcmp.eq.s32.totalorder %v183, %v228
    %vm239 = vcmp.eq.s32.totalorder %v184, %v228
    %vm240 = vcmp.eq.s32.totalorder %v185, %v228
    %vm241 = vcmp.eq.s32.totalorder %v186, %v228
    %v242 = vperm.slane %v172, 1
    %v243 = vsel %vm229, %v242, 0.0
    %v244 = vsel %vm230, %v242, 0.0
    %v245 = vsel %vm231, %v242, 0.0
    %v246 = vsel %vm232, %v242, 0.0
    %v247 = vsel %vm233, %v242, 0.0
    %v248 = vsel %vm234, %v242, 0.0
    %v249 = vsel %vm235, %v242, 0.0
    %v250 = vsel %vm236, %v242, 0.0
    %v251 = vsel %vm237, %v242, 0.0
    %v252 = vsel %vm238, %v242, 0.0
    %v253 = vsel %vm239, %v242, 0.0
    %v254 = vsel %vm240, %v242, 0.0
    %v255 = vsel %vm241, %v242, 0.0
    %v256 = vadd.f32 %v215, %v243
    %v257 = vadd.f32 %v216, %v244
    %v258 = vadd.f32 %v217, %v245
    %v259 = vadd.f32 %v218, %v246
    %v260 = vadd.f32 %v219, %v247
    %v261 = vadd.f32 %v220, %v248
    %v262 = vadd.f32 %v221, %v249
    %v263 = vadd.f32 %v222, %v250
    %v264 = vadd.f32 %v223, %v251
    %v265 = vadd.f32 %v224, %v252
    %v266 = vadd.f32 %v225, %v253
    %v267 = vadd.f32 %v226, %v254
    %v268 = vadd.f32 %v227, %v255
    %v269 = vperm.slane %v147, 2
    %vm270 = vcmp.eq.s32.totalorder %v174, %v269
    %vm271 = vcmp.eq.s32.totalorder %v175, %v269
    %vm272 = vcmp.eq.s32.totalorder %v176, %v269
    %vm273 = vcmp.eq.s32.totalorder %v177, %v269
    %vm274 = vcmp.eq.s32.totalorder %v178, %v269
    %vm275 = vcmp.eq.s32.totalorder %v179, %v269
    %vm276 = vcmp.eq.s32.totalorder %v180, %v269
    %vm277 = vcmp.eq.s32.totalorder %v181, %v269
    %vm278 = vcmp.eq.s32.totalorder %v182, %v269
    %vm279 = vcmp.eq.s32.totalorder %v183, %v269
    %vm280 = vcmp.eq.s32.totalorder %v184, %v269
    %vm281 = vcmp.eq.s32.totalorder %v185, %v269
    %vm282 = vcmp.eq.s32.totalorder %v186, %v269
    %v283 = vperm.slane %v172, 2
    %v284 = vsel %vm270, %v283, 0.0
    %v285 = vsel %vm271, %v283, 0.0
    %v286 = vsel %vm272, %v283, 0.0
    %v287 = vsel %vm273, %v283, 0.0
    %v288 = vsel %vm274, %v283, 0.0
    %v289 = vsel %vm275, %v283, 0.0
    %v290 = vsel %vm276, %v283, 0.0
    %v291 = vsel %vm277, %v283, 0.0
    %v292 = vsel %vm278, %v283, 0.0
    %v293 = vsel %vm279, %v283, 0.0
    %v294 = vsel %vm280, %v283, 0.0
    %v295 = vsel %vm281, %v283, 0.0
    %v296 = vsel %vm282, %v283, 0.0
    %v297 = vadd.f32 %v256, %v284
    %v298 = vadd.f32 %v257, %v285
    %v299 = vadd.f32 %v258, %v286
    %v300 = vadd.f32 %v259, %v287
    %v301 = vadd.f32 %v260, %v288
    %v302 = vadd.f32 %v261, %v289
    %v303 = vadd.f32 %v262, %v290
    %v304 = vadd.f32 %v263, %v291
    %v305 = vadd.f32 %v264, %v292
    %v306 = vadd.f32 %v265, %v293
    %v307 = vadd.f32 %v266, %v294
    %v308 = vadd.f32 %v267, %v295
    %v309 = vadd.f32 %v268, %v296
    %v310 = vperm.slane %v147, 3
    %vm311 = vcmp.eq.s32.totalorder %v174, %v310
    %vm312 = vcmp.eq.s32.totalorder %v175, %v310
    %vm313 = vcmp.eq.s32.totalorder %v176, %v310
    %vm314 = vcmp.eq.s32.totalorder %v177, %v310
    %vm315 = vcmp.eq.s32.totalorder %v178, %v310
    %vm316 = vcmp.eq.s32.totalorder %v179, %v310
    %vm317 = vcmp.eq.s32.totalorder %v180, %v310
    %vm318 = vcmp.eq.s32.totalorder %v181, %v310
    %vm319 = vcmp.eq.s32.totalorder %v182, %v310
    %vm320 = vcmp.eq.s32.totalorder %v183, %v310
    %vm321 = vcmp.eq.s32.totalorder %v184, %v310
    %vm322 = vcmp.eq.s32.totalorder %v185, %v310
    %vm323 = vcmp.eq.s32.totalorder %v186, %v310
    %v324 = vperm.slane %v172, 3
    %v325 = vsel %vm311, %v324, 0.0
    %v326 = vsel %vm312, %v324, 0.0
    %v327 = vsel %vm313, %v324, 0.0
    %v328 = vsel %vm314, %v324, 0.0
    %v329 = vsel %vm315, %v324, 0.0
    %v330 = vsel %vm316, %v324, 0.0
    %v331 = vsel %vm317, %v324, 0.0
    %v332 = vsel %vm318, %v324, 0.0
    %v333 = vsel %vm319, %v324, 0.0
    %v334 = vsel %vm320, %v324, 0.0
    %v335 = vsel %vm321, %v324, 0.0
    %v336 = vsel %vm322, %v324, 0.0
    %v337 = vsel %vm323, %v324, 0.0
    %v338 = vadd.f32 %v297, %v325
    %v339 = vadd.f32 %v298, %v326
    %v340 = vadd.f32 %v299, %v327
    %v341 = vadd.f32 %v300, %v328
    %v342 = vadd.f32 %v301, %v329
    %v343 = vadd.f32 %v302, %v330
    %v344 = vadd.f32 %v303, %v331
    %v345 = vadd.f32 %v304, %v332
    %v346 = vadd.f32 %v305, %v333
    %v347 = vadd.f32 %v306, %v334
    %v348 = vadd.f32 %v307, %v335
    %v349 = vadd.f32 %v308, %v336
    %v350 = vadd.f32 %v309, %v337
    %v351 = vperm.slane %v147, 4
    %vm352 = vcmp.eq.s32.totalorder %v174, %v351
    %vm353 = vcmp.eq.s32.totalorder %v175, %v351
    %vm354 = vcmp.eq.s32.totalorder %v176, %v351
    %vm355 = vcmp.eq.s32.totalorder %v177, %v351
    %vm356 = vcmp.eq.s32.totalorder %v178, %v351
    %vm357 = vcmp.eq.s32.totalorder %v179, %v351
    %vm358 = vcmp.eq.s32.totalorder %v180, %v351
    %vm359 = vcmp.eq.s32.totalorder %v181, %v351
    %vm360 = vcmp.eq.s32.totalorder %v182, %v351
    %vm361 = vcmp.eq.s32.totalorder %v183, %v351
    %vm362 = vcmp.eq.s32.totalorder %v184, %v351
    %vm363 = vcmp.eq.s32.totalorder %v185, %v351
    %vm364 = vcmp.eq.s32.totalorder %v186, %v351
    %v365 = vperm.slane %v172, 4
    %v366 = vsel %vm352, %v365, 0.0
    %v367 = vsel %vm353, %v365, 0.0
    %v368 = vsel %vm354, %v365, 0.0
    %v369 = vsel %vm355, %v365, 0.0
    %v370 = vsel %vm356, %v365, 0.0
    %v371 = vsel %vm357, %v365, 0.0
    %v372 = vsel %vm358, %v365, 0.0
    %v373 = vsel %vm359, %v365, 0.0
    %v374 = vsel %vm360, %v365, 0.0
    %v375 = vsel %vm361, %v365, 0.0
    %v376 = vsel %vm362, %v365, 0.0
    %v377 = vsel %vm363, %v365, 0.0
    %v378 = vsel %vm364, %v365, 0.0
    %v379 = vadd.f32 %v338, %v366
    %v380 = vadd.f32 %v339, %v367
    %v381 = vadd.f32 %v340, %v368
    %v382 = vadd.f32 %v341, %v369
    %v383 = vadd.f32 %v342, %v370
    %v384 = vadd.f32 %v343, %v371
    %v385 = vadd.f32 %v344, %v372
    %v386 = vadd.f32 %v345, %v373
    %v387 = vadd.f32 %v346, %v374
    %v388 = vadd.f32 %v347, %v375
    %v389 = vadd.f32 %v348, %v376
    %v390 = vadd.f32 %v349, %v377
    %v391 = vadd.f32 %v350, %v378
    %v392 = vperm.slane %v147, 5
    %vm393 = vcmp.eq.s32.totalorder %v174, %v392
    %vm394 = vcmp.eq.s32.totalorder %v175, %v392
    %vm395 = vcmp.eq.s32.totalorder %v176, %v392
    %vm396 = vcmp.eq.s32.totalorder %v177, %v392
    %vm397 = vcmp.eq.s32.totalorder %v178, %v392
    %vm398 = vcmp.eq.s32.totalorder %v179, %v392
    %vm399 = vcmp.eq.s32.totalorder %v180, %v392
    %vm400 = vcmp.eq.s32.totalorder %v181, %v392
    %vm401 = vcmp.eq.s32.totalorder %v182, %v392
    %vm402 = vcmp.eq.s32.totalorder %v183, %v392
    %vm403 = vcmp.eq.s32.totalorder %v184, %v392
    %vm404 = vcmp.eq.s32.totalorder %v185, %v392
    %vm405 = vcmp.eq.s32.totalorder %v186, %v392
    %v406 = vperm.slane %v172, 5
    %v407 = vsel %vm393, %v406, 0.0
    %v408 = vsel %vm394, %v406, 0.0
    %v409 = vsel %vm395, %v406, 0.0
    %v410 = vsel %vm396, %v406, 0.0
    %v411 = vsel %vm397, %v406, 0.0
    %v412 = vsel %vm398, %v406, 0.0
    %v413 = vsel %vm399, %v406, 0.0
    %v414 = vsel %vm400, %v406, 0.0
    %v415 = vsel %vm401, %v406, 0.0
    %v416 = vsel %vm402, %v406, 0.0
    %v417 = vsel %vm403, %v406, 0.0
    %v418 = vsel %vm404, %v406, 0.0
    %v419 = vsel %vm405, %v406, 0.0
    %v420 = vadd.f32 %v379, %v407
    %v421 = vadd.f32 %v380, %v408
    %v422 = vadd.f32 %v381, %v409
    %v423 = vadd.f32 %v382, %v410
    %v424 = vadd.f32 %v383, %v411
    %v425 = vadd.f32 %v384, %v412
    %v426 = vadd.f32 %v385, %v413
    %v427 = vadd.f32 %v386, %v414
    %v428 = vadd.f32 %v387, %v415
    %v429 = vadd.f32 %v388, %v416
    %v430 = vadd.f32 %v389, %v417
    %v431 = vadd.f32 %v390, %v418
    %v432 = vadd.f32 %v391, %v419
    %v433 = vperm.slane %v147, 6
    %vm434 = vcmp.eq.s32.totalorder %v174, %v433
    %vm435 = vcmp.eq.s32.totalorder %v175, %v433
    %vm436 = vcmp.eq.s32.totalorder %v176, %v433
    %vm437 = vcmp.eq.s32.totalorder %v177, %v433
    %vm438 = vcmp.eq.s32.totalorder %v178, %v433
    %vm439 = vcmp.eq.s32.totalorder %v179, %v433
    %vm440 = vcmp.eq.s32.totalorder %v180, %v433
    %vm441 = vcmp.eq.s32.totalorder %v181, %v433
    %vm442 = vcmp.eq.s32.totalorder %v182, %v433
    %vm443 = vcmp.eq.s32.totalorder %v183, %v433
    %vm444 = vcmp.eq.s32.totalorder %v184, %v433
    %vm445 = vcmp.eq.s32.totalorder %v185, %v433
    %vm446 = vcmp.eq.s32.totalorder %v186, %v433
    %v447 = vperm.slane %v172, 6
    %v448 = vsel %vm434, %v447, 0.0
    %v449 = vsel %vm435, %v447, 0.0
    %v450 = vsel %vm436, %v447, 0.0
    %v451 = vsel %vm437, %v447, 0.0
    %v452 = vsel %vm438, %v447, 0.0
    %v453 = vsel %vm439, %v447, 0.0
    %v454 = vsel %vm440, %v447, 0.0
    %v455 = vsel %vm441, %v447, 0.0
    %v456 = vsel %vm442, %v447, 0.0
    %v457 = vsel %vm443, %v447, 0.0
    %v458 = vsel %vm444, %v447, 0.0
    %v459 = vsel %vm445, %v447, 0.0
    %v460 = vsel %vm446, %v447, 0.0
    %v461 = vadd.f32 %v420, %v448
    %v462 = vadd.f32 %v421, %v449
    %v463 = vadd.f32 %v422, %v450
    %v464 = vadd.f32 %v423, %v451
    %v465 = vadd.f32 %v424, %v452
    %v466 = vadd.f32 %v425, %v453
    %v467 = vadd.f32 %v426, %v454
    %v468 = vadd.f32 %v427, %v455
    %v469 = vadd.f32 %v428, %v456
    %v470 = vadd.f32 %v429, %v457
    %v471 = vadd.f32 %v430, %v458
    %v472 = vadd.f32 %v431, %v459
    %v473 = vadd.f32 %v432, %v460
    %v474 = vperm.slane %v147, 7
    %vm475 = vcmp.eq.s32.totalorder %v174, %v474
    %vm476 = vcmp.eq.s32.totalorder %v175, %v474
    %vm477 = vcmp.eq.s32.totalorder %v176, %v474
    %vm478 = vcmp.eq.s32.totalorder %v177, %v474
    %vm479 = vcmp.eq.s32.totalorder %v178, %v474
    %vm480 = vcmp.eq.s32.totalorder %v179, %v474
    %vm481 = vcmp.eq.s32.totalorder %v180, %v474
    %vm482 = vcmp.eq.s32.totalorder %v181, %v474
    %vm483 = vcmp.eq.s32.totalorder %v182, %v474
    %vm484 = vcmp.eq.s32.totalorder %v183, %v474
    %vm485 = vcmp.eq.s32.totalorder %v184, %v474
    %vm486 = vcmp.eq.s32.totalorder %v185, %v474
    %vm487 = vcmp.eq.s32.totalorder %v186, %v474
    %v488 = vperm.slane %v172, 7
    %v489 = vsel %vm475, %v488, 0.0
    %v490 = vsel %vm476, %v488, 0.0
    %v491 = vsel %vm477, %v488, 0.0
    %v492 = vsel %vm478, %v488, 0.0
    %v493 = vsel %vm479, %v488, 0.0
    %v494 = vsel %vm480, %v488, 0.0
    %v495 = vsel %vm481, %v488, 0.0
    %v496 = vsel %vm482, %v488, 0.0
    %v497 = vsel %vm483, %v488, 0.0
    %v498 = vsel %vm484, %v488, 0.0
    %v499 = vsel %vm485, %v488, 0.0
    %v500 = vsel %vm486, %v488, 0.0
    %v501 = vsel %vm487, %v488, 0.0
    %v502 = vadd.f32 %v461, %v489
    %v503 = vadd.f32 %v462, %v490
    %v504 = vadd.f32 %v463, %v491
    %v505 = vadd.f32 %v464, %v492
    %v506 = vadd.f32 %v465, %v493
    %v507 = vadd.f32 %v466, %v494
    %v508 = vadd.f32 %v467, %v495
    %v509 = vadd.f32 %v468, %v496
    %v510 = vadd.f32 %v469, %v497
    %v511 = vadd.f32 %v470, %v498
    %v512 = vadd.f32 %v471, %v499
    %v513 = vadd.f32 %v472, %v500
    %v514 = vadd.f32 %v473, %v501
    %v515 = vld [vmem:[%s6] sm:$0xff]
    %v516 = vld [vmem:[%s6 + $0x8] sm:$0xff]
    %v517 = vld [vmem:[%s6 + $0x10] sm:$0xff]
    %v518 = vld [vmem:[%s6 + $0x18] sm:$0xff]
    %v519 = vld [vmem:[%s6 + $0x20] sm:$0xff]
    %v520 = vld [vmem:[%s6 + $0x28] sm:$0xff]
    %v521 = vld [vmem:[%s6 + $0x30] sm:$0xff]
    %v522 = vld [vmem:[%s6 + $0x38] sm:$0xff]
    %v523 = vld [vmem:[%s6 + $0x40] sm:$0xff]
    %v524 = vld [vmem:[%s6 + $0x48] sm:$0xff]
    %v525 = vld [vmem:[%s6 + $0x50] sm:$0xff]
    %v526 = vld [vmem:[%s6 + $0x58] sm:$0xff]
    %v527 = vld [vmem:[%s6 + $0x60] sm:$0xf]
    %529 = vset.pattern.permute.xlu0 0
    %530 = vperm.xlu0 %529, %v515
    %v531 = vpop.permute.xlu0 %530
    %534 = vset.pattern.permute.xlu0 0
    %535 = vperm.xlu0 %534, %v516
    %v536 = vpop.permute.xlu0 %535
    %539 = vset.pattern.permute.xlu0 0
    %540 = vperm.xlu0 %539, %v517
    %v541 = vpop.permute.xlu0 %540
    %544 = vset.pattern.permute.xlu0 0
    %545 = vperm.xlu0 %544, %v518
    %v546 = vpop.permute.xlu0 %545
    %549 = vset.pattern.permute.xlu0 0
    %550 = vperm.xlu0 %549, %v519
    %v551 = vpop.permute.xlu0 %550
    %554 = vset.pattern.permute.xlu0 0
    %555 = vperm.xlu0 %554, %v520
    %v556 = vpop.permute.xlu0 %555
    %559 = vset.pattern.permute.xlu0 0
    %560 = vperm.xlu0 %559, %v521
    %v561 = vpop.permute.xlu0 %560
    %564 = vset.pattern.permute.xlu0 0
    %565 = vperm.xlu0 %564, %v522
    %v566 = vpop.permute.xlu0 %565
    %569 = vset.pattern.permute.xlu0 0
    %570 = vperm.xlu0 %569, %v523
    %v571 = vpop.permute.xlu0 %570
    %574 = vset.pattern.permute.xlu0 0
    %575 = vperm.xlu0 %574, %v524
    %v576 = vpop.permute.xlu0 %575
    %579 = vset.pattern.permute.xlu0 0
    %580 = vperm.xlu0 %579, %v525
    %v581 = vpop.permute.xlu0 %580
    %584 = vset.pattern.permute.xlu0 0
    %585 = vperm.xlu0 %584, %v526
    %v586 = vpop.permute.xlu0 %585
    %589 = vset.pattern.permute.xlu0 0
    %590 = vperm.xlu0 %589, %v527
    %v591 = vpop.permute.xlu0 %590
    %v593 = vmul.f32 %v502, %v531
    %v594 = vmul.f32 %v503, %v536
    %v595 = vmul.f32 %v504, %v541
    %v596 = vmul.f32 %v505, %v546
    %v597 = vmul.f32 %v506, %v551
    %v598 = vmul.f32 %v507, %v556
    %v599 = vmul.f32 %v508, %v561
    %v600 = vmul.f32 %v509, %v566
    %v601 = vmul.f32 %v510, %v571
    %v602 = vmul.f32 %v511, %v576
    %v603 = vmul.f32 %v512, %v581
    %v604 = vmul.f32 %v513, %v586
    %v605 = vmul.f32 %v514, %v591
    %v606 = vsel %vm132, %v593, 0.0
    %v607 = vsel %vm132, %v594, 0.0
    %v608 = vadd.f32 %v606, %v607
    %v609 = vsel %vm132, %v595, 0.0
    %v610 = vadd.f32 %v608, %v609
    %v611 = vsel %vm132, %v596, 0.0
    %v612 = vadd.f32 %v610, %v611
    %v613 = vsel %vm132, %v597, 0.0
    %v614 = vadd.f32 %v612, %v613
    %v615 = vsel %vm132, %v598, 0.0
    %v616 = vadd.f32 %v614, %v615
    %v617 = vsel %vm132, %v599, 0.0
    %v618 = vadd.f32 %v616, %v617
    %v619 = vsel %vm132, %v600, 0.0
    %v620 = vadd.f32 %v618, %v619
    %v621 = vsel %vm132, %v601, 0.0
    %v622 = vadd.f32 %v620, %v621
    %v623 = vsel %vm132, %v602, 0.0
    %v624 = vadd.f32 %v622, %v623
    %v625 = vsel %vm132, %v603, 0.0
    %v626 = vadd.f32 %v624, %v625
    %v627 = vsel %vm132, %v604, 0.0
    %v628 = vadd.f32 %v626, %v627
    %vm629 = vcmask 60416
    %v630 = vsel %vm629, %v605, 0.0
    %v631 = vadd.f32 %v628, %v630
    %v632 = vrot.slane %v631, 4
    %v633 = vadd.f32 %v631, %v632
    %v634 = vrot.slane %v633, 2
    %v635 = vadd.f32 %v633, %v634
    %v636 = vrot.slane %v635, 1
    %v637 = vadd.f32 %v635, %v636
    %v638 = vadd.f32 %v146, %v637
    %v639 = vxor.u32 %v638, 2147483648
    %v640 = vmul.f32 %v639, 1.442695
    %v641 = vpow.pop %v640
    %v642 = vadd.f32 %v641, 1.0
    %v643 = vrcp.pop %v642
    %v644 = vmul.f32 %v642, %v643
    %v645 = vsub.f32 1.0, %v644
    %v646 = vmul.f32 %v643, %v645
    %v647 = vadd.f32 %v643, %v646
    %vm648 = vweird.f32 %v642
    %vm649 = vweird.f32 %v643
    %vm650 = vmor %vm648, %vm649
    %v651 = vsel %vm650, %v643, %v647
    %v652 = vand.u32 2147483647, %v642
    %vm653 = vcmp.eq.f32.partialorder %v652, 8.507059e+37
    %v654 = vand.u32 %v642, 2147483648
    %v655 = vor.u32 1.1754944e-38, %v654
    %v656 = vsel %vm653, %v655, %v651
    %v657 = vmul.f32 1.0, %v656
    %vm658 = vcmask 57344
    %659 = vst.msk [vmem:[#allocation3] sm:$0x1] %vm658, %v657
    // Predicated region
    $region34: #{tpu_custom_call.1} parent=1 // pred_check
      _
    $region35: #{tpu_custom_call.1} parent=1 // pred_check_branch
      %661 = sbr.rel (0) target = $region37
    $region36: #{tpu_custom_call.1} parent=1 // pred_region
      %663 = vsyncadd [#allocation4], 0
      %s665 = sshll.u32 [#allocation3], 4
      %s666 = int_to_ptr.vmem [resolvable:$true] %s665
      %s667 = sshll.u32 %s8, 4
      %s668 = int_to_ptr.hbm [resolvable:$true] %s667
      %670 = dma.vmem_to_hbm [thread:$0]  %s666, 16, %s668, [#allocation4]
    $region37: #{tpu_custom_call.1} parent=1 // pred_fallthru
      _
    // Predicated region
    $region38: #{tpu_custom_call.1} parent=1 // pred_check
      _
    $region39: #{tpu_custom_call.1} parent=1 // pred_check_branch
      %672 = sbr.rel (0) target = $region41
    $region40: #{tpu_custom_call.1} parent=1 // pred_region
      %674 = dma.done [#allocation4], 16
    $region41: #{tpu_custom_call.1} parent=1 // pred_fallthru
      _
    %675 = vsyncpa [#allocation4], 1

</llo_original>
